<compile_context>
chip_gen: v7x
topology: tpu7x:2x2x1
jax: 0.10.0
libtpu: 0.0.40
codegen_flags: <defaults>
</compile_context>

<pallas_src>
import functools

import jax
import jax.numpy as jnp
from jax.experimental import pallas as pl
from jax.experimental.pallas import tpu as pltpu


def _round_up(x, m):
    return (x + m - 1) // m * m


def _proto_kernel(emb_ref, protoT_ref, act_ref, q_ref, w_ref, sim_ref,
                  *, inv_temp):
    # emb: [TB, D], protoT: [D, P], act: [P, A]
    emb = emb_ref[...]

    # similarities = emb @ prototypes.T  (prototypes pre-transposed in wrapper)
    sim = jnp.dot(emb, protoT_ref[...], preferred_element_type=jnp.float32)
    sim_ref[...] = sim

    # scaled similarities: baked-in scalar reciprocal -> single vector multiply.
    scaled = sim * inv_temp

    # numerically-stable softmax over the prototype axis (exact divide:
    # essentially free on a mem-bound kernel, keeps weights summing to 1).
    m = jnp.max(scaled, axis=1, keepdims=True)
    e = jnp.exp(scaled - m)
    denom = jnp.sum(e, axis=1, keepdims=True)
    w = e / denom
    w_ref[...] = w

    # q_values = weights @ prototype_actions
    q_ref[...] = jnp.dot(w, act_ref[...], preferred_element_type=jnp.float32)


def proto_module_forward(embeddings, prototypes, prototype_actions, temperature):
    """Pallas implementation of ProtoModuleNetwork.forward.

    embeddings:        [B, D] float32
    prototypes:        [P, D] float32 (rows already L2-normalized)
    prototype_actions: [P, A] float32
    Returns (q_values [B, A], prototype_weights [B, P], similarities [B, P]).
    """
    embeddings = jnp.asarray(embeddings, jnp.float32)
    prototypes = jnp.asarray(prototypes, jnp.float32)
    prototype_actions = jnp.asarray(prototype_actions, jnp.float32)

    # Robust dimension handling (mirrors the PyTorch branches).
    if embeddings.ndim == 0:
        embeddings = embeddings[None, None]
    elif embeddings.ndim == 1:
        embeddings = embeddings[None, :]
    D = prototypes.shape[1]
    if embeddings.shape[-1] != D:
        if embeddings.shape[-1] > D:
            embeddings = embeddings[:, :D]
        else:
            embeddings = jnp.pad(
                embeddings, ((0, 0), (0, D - embeddings.shape[-1])))
    # TODO(synk): the >10000-dim random-projection fallback (fresh torch.randn
    # per call, non-deterministic) and the try/except reshape fallback are not
    # reproduced here.

    B = embeddings.shape[0]
    P, A = prototype_actions.shape

    # Prototypes stored transposed (weight, done once) -> MXU-friendly jnp.dot.
    protoT = prototypes.T  # [D, P]

    # Batch tile selection: big tiles (less per-step overhead), but keep >= 2
    # grid steps for moderate batches so v7x's two TensorCores both get work.
    MAX_TILE_B = 512
    if B <= 8:
        tile_b = B                       # block dim == full array dim (legal)
    else:
        tile_b = min(MAX_TILE_B, max(8, _round_up((B + 1) // 2, 8)))
    grid = pl.cdiv(B, tile_b)            # edge block handled by Pallas masking

    kernel = functools.partial(_proto_kernel, inv_temp=1.0 / float(temperature))

    q, w, sim = pl.pallas_call(
        kernel,
        out_shape=(
            jax.ShapeDtypeStruct((B, A), jnp.float32),
            jax.ShapeDtypeStruct((B, P), jnp.float32),
            jax.ShapeDtypeStruct((B, P), jnp.float32),
        ),
        grid_spec=pltpu.PrefetchScalarGridSpec(
            num_scalar_prefetch=0,
            grid=(grid,),
            in_specs=[
                pl.BlockSpec((tile_b, D), lambda i: (i, 0)),  # embeddings stream
                pl.BlockSpec((D, P), lambda i: (0, 0)),       # prototypes^T (resident)
                pl.BlockSpec((P, A), lambda i: (0, 0)),       # prototype_actions (resident)
            ],
            out_specs=[
                pl.BlockSpec((tile_b, A), lambda i: (i, 0)),  # q_values
                pl.BlockSpec((tile_b, P), lambda i: (i, 0)),  # prototype_weights
                pl.BlockSpec((tile_b, P), lambda i: (i, 0)),  # similarities
            ],
        ),
        compiler_params=pltpu.CompilerParams(
            dimension_semantics=("parallel",)),
    )(embeddings, protoT, prototype_actions)

    return q, w, sim


def init_params(key, embedding_dim, action_size, num_prototypes):
    k1, k2 = jax.random.split(key)
    prototypes = jax.random.normal(k1, (num_prototypes, embedding_dim), jnp.float32)
    # nn.functional.normalize(p=2, dim=1)
    norm = jnp.sqrt(jnp.sum(prototypes * prototypes, axis=1, keepdims=True))
    prototypes = prototypes / jnp.maximum(norm, 1e-12)
    prototype_actions = jax.random.normal(k2, (num_prototypes, action_size), jnp.float32)
    return prototypes, prototype_actions


if __name__ == "__main__":
    embedding_dim = 32
    action_size = 4
    num_prototypes = 10
    temperature = 0.5
    batch = 8

    key = jax.random.PRNGKey(0)
    kp, kx = jax.random.split(key)
    prototypes, prototype_actions = init_params(
        kp, embedding_dim, action_size, num_prototypes)
    embeddings = jax.random.normal(kx, (batch, embedding_dim), jnp.float32)

    q, w, sim = proto_module_forward(
        embeddings, prototypes, prototype_actions, temperature)
    jax.block_until_ready((q, w, sim))

    # Sanity check against plain-JAX reference.
    sim_ref = embeddings @ prototypes.T
    w_ref = jax.nn.softmax(sim_ref / temperature, axis=1)
    q_ref = w_ref @ prototype_actions
    assert q.shape == (batch, action_size)
    assert w.shape == (batch, num_prototypes)
    assert sim.shape == (batch, num_prototypes)
    assert jnp.allclose(sim, sim_ref, atol=1e-5, rtol=1e-5), "similarities mismatch"
    assert jnp.allclose(w, w_ref, atol=1e-5, rtol=1e-5), "weights mismatch"
    assert jnp.allclose(q, q_ref, atol=1e-5, rtol=1e-5), "q_values mismatch"
    assert jnp.allclose(jnp.sum(w, axis=1), 1.0, atol=1e-5), "softmax not normalized"

    print("KERNEL_OK")
</pallas_src>

<mosaic_0001>
module attributes {stable_mosaic.version = 11 : i64} {
  func.func @_proto_kernel(%arg0: i32, %arg1: memref<8x32xf32, #tpu.memory_space<vmem>>, %arg2: memref<32x10xf32, #tpu.memory_space<vmem>>, %arg3: memref<10x4xf32, #tpu.memory_space<vmem>>, %arg4: memref<8x4xf32, #tpu.memory_space<vmem>>, %arg5: memref<8x10xf32, #tpu.memory_space<vmem>>, %arg6: memref<8x10xf32, #tpu.memory_space<vmem>>) attributes {dimension_semantics = [#tpu.dimension_semantics<parallel>], iteration_bounds = array<i64: 1>, scalar_prefetch = 0 : i64, scratch_operands = 0 : i64, tpu.core_type = #tpu.core_type<tc>, window_params = [{transform_indices = @transform_0, window_bounds = array<i64: 8, 32>}, {pipeline_mode = #tpu.pipeline_mode<synchronous>, transform_indices = @transform_1, window_bounds = array<i64: 32, 10>}, {pipeline_mode = #tpu.pipeline_mode<synchronous>, transform_indices = @transform_2, window_bounds = array<i64: 10, 4>}, {transform_indices = @transform_3, window_bounds = array<i64: 8, 4>}, {transform_indices = @transform_4, window_bounds = array<i64: 8, 10>}, {transform_indices = @transform_5, window_bounds = array<i64: 8, 10>}]} {
    %c0 = arith.constant 0 : index
    %c0_0 = arith.constant 0 : index
    %0 = vector.load %arg1[%c0, %c0_0] : memref<8x32xf32, #tpu.memory_space<vmem>>, vector<8x32xf32>
    %c0_1 = arith.constant 0 : index
    %c0_2 = arith.constant 0 : index
    %1 = vector.load %arg2[%c0_1, %c0_2] : memref<32x10xf32, #tpu.memory_space<vmem>>, vector<32x10xf32>
    %cst = arith.constant dense<0.000000e+00> : vector<8x10xf32>
    %2 = tpu.matmul %0, %1, %cst {dimension_numbers = #tpu.dot_dimension_numbers<[1], [0], [0], [1], [0, 0, 1, 1], [], []>} : vector<8x32xf32>, vector<32x10xf32>, vector<8x10xf32> -> vector<8x10xf32>
    %c0_3 = arith.constant 0 : index
    %c0_4 = arith.constant 0 : index
    %3 = vector.load %arg6[%c0_3, %c0_4] : memref<8x10xf32, #tpu.memory_space<vmem>>, vector<8x10xf32>
    tpu.vector_store %arg6[%c0_3, %c0_4], %2 {strides = array<i32>} : memref<8x10xf32, #tpu.memory_space<vmem>>, vector<8x10xf32>,
    %cst_5 = arith.constant 2.000000e+00 : f32
    %4 = vector.broadcast %cst_5 : f32 to vector<8x10xf32>
    %5 = arith.mulf %2, %4 : vector<8x10xf32>
    %cst_6 = arith.constant dense<0xFF800000> : vector<8xf32>
    %6 = vector.multi_reduction <maximumf>, %5, %cst_6 [1] : vector<8x10xf32> to vector<8xf32>
    %7 = vector.shape_cast %6 : vector<8xf32> to vector<8x1xf32>
    %8 = vector.broadcast %7 : vector<8x1xf32> to vector<8x10xf32>
    %9 = arith.subf %5, %8 : vector<8x10xf32>
    %10 = math.exp %9 : vector<8x10xf32>
    %cst_7 = arith.constant dense<0.000000e+00> : vector<8xf32>
    %11 = vector.multi_reduction <add>, %10, %cst_7 [1] : vector<8x10xf32> to vector<8xf32>
    %12 = vector.shape_cast %11 : vector<8xf32> to vector<8x1xf32>
    %13 = vector.broadcast %12 : vector<8x1xf32> to vector<8x10xf32>
    %14 = arith.divf %10, %13 : vector<8x10xf32>
    %c0_8 = arith.constant 0 : index
    %c0_9 = arith.constant 0 : index
    %15 = vector.load %arg5[%c0_8, %c0_9] : memref<8x10xf32, #tpu.memory_space<vmem>>, vector<8x10xf32>
    tpu.vector_store %arg5[%c0_8, %c0_9], %14 {strides = array<i32>} : memref<8x10xf32, #tpu.memory_space<vmem>>, vector<8x10xf32>,
    %c0_10 = arith.constant 0 : index
    %c0_11 = arith.constant 0 : index
    %16 = vector.load %arg3[%c0_10, %c0_11] : memref<10x4xf32, #tpu.memory_space<vmem>>, vector<10x4xf32>
    %cst_12 = arith.constant dense<0.000000e+00> : vector<8x4xf32>
    %17 = tpu.matmul %14, %16, %cst_12 {dimension_numbers = #tpu.dot_dimension_numbers<[1], [0], [0], [1], [0, 0, 1, 1], [], []>} : vector<8x10xf32>, vector<10x4xf32>, vector<8x4xf32> -> vector<8x4xf32>
    %c0_13 = arith.constant 0 : index
    %c0_14 = arith.constant 0 : index
    %18 = vector.load %arg4[%c0_13, %c0_14] : memref<8x4xf32, #tpu.memory_space<vmem>>, vector<8x4xf32>
    tpu.vector_store %arg4[%c0_13, %c0_14], %17 {strides = array<i32>} : memref<8x4xf32, #tpu.memory_space<vmem>>, vector<8x4xf32>,
    return
  }
  func.func @transform_0(%arg0: i32) -> (i32, i32) {
    %c0_i32 = arith.constant 0 : i32
    %c0_i32_0 = arith.constant 0 : i32
    return %arg0, %c0_i32 : i32, i32
  }
  func.func @transform_1(%arg0: i32) -> (i32, i32) {
    %c0_i32 = arith.constant 0 : i32
    %c0_i32_0 = arith.constant 0 : i32
    %c0_i32_1 = arith.constant 0 : i32
    return %c0_i32, %c0_i32_0 : i32, i32
  }
  func.func @transform_2(%arg0: i32) -> (i32, i32) {
    %c0_i32 = arith.constant 0 : i32
    %c0_i32_0 = arith.constant 0 : i32
    %c0_i32_1 = arith.constant 0 : i32
    return %c0_i32, %c0_i32_0 : i32, i32
  }
  func.func @transform_3(%arg0: i32) -> (i32, i32) {
    %c0_i32 = arith.constant 0 : i32
    %c0_i32_0 = arith.constant 0 : i32
    return %arg0, %c0_i32 : i32, i32
  }
  func.func @transform_4(%arg0: i32) -> (i32, i32) {
    %c0_i32 = arith.constant 0 : i32
    %c0_i32_0 = arith.constant 0 : i32
    return %arg0, %c0_i32 : i32, i32
  }
  func.func @transform_5(%arg0: i32) -> (i32, i32) {
    %c0_i32 = arith.constant 0 : i32
    %c0_i32_0 = arith.constant 0 : i32
    return %arg0, %c0_i32 : i32, i32
  }
}

</mosaic_0001>

<llo_original>
// kernel: tpu_custom_call.1
$region0: #{tpu_custom_call.1}
  #allocation0 [shape = 'u32[]', space=smem, size = 0x4, offset = 0x4, fixed_abs, tag = 'smem constant byte address 0x4 - core index']
  #allocation1 [shape = 'u32[144,128]{1,0:T(1,128)}', space=vmem, size = 0x12000, scoped, tag = 'internal scratch']
  %s0 = inlined_call_operand.vmem [shape: f32[8,32], index: 0, kind: input, shape index: {}]
  %s1 = inlined_call_operand.vmem [shape: f32[32,10], index: 1, kind: input, shape index: {}]
  %s2 = inlined_call_operand.vmem [shape: f32[10,4], index: 2, kind: input, shape index: {}]
  %s3 = inlined_call_operand.vmem [shape: f32[8,4], index: 3, kind: output, shape index: {0}]
  %s4 = inlined_call_operand.hbm [shape: f32[8,10], index: 4, kind: output, shape index: {1}]
  %s5 = inlined_call_operand.hbm [shape: f32[8,10], index: 5, kind: output, shape index: {2}]
  %6 = xla_tuple %s3, %s4, %s5
  %s7 = sld [smem:[#allocation0]]
  $region38: #{tpu_custom_call.1} parent=0
    _
  %s9 = ssub.s32 1, %s7
  %s10 = scalar_select 0, %s9, %s7
  $region1: #{tpu_custom_call.1} parent=0
    #allocation2 [shape = 'u8[4096]{0}', space=vmem, size = 0x1000, scoped, tag = 'output window, operand 1, single buffered']
    #allocation3 [shape = 's32[1]{0}', space=sflag, size = 0x4, scoped, tag = 'scoped memory for tpu_custom_call.1']
    #allocation4 [shape = 'u8[4096]{0}', space=vmem, size = 0x1000, scoped, tag = 'output window, operand 2, single buffered']
    #allocation5 [shape = 's32[1]{0}', space=sflag, size = 0x4, scoped, tag = 'scoped memory for tpu_custom_call.1']
    %11 = vsyncpa [#allocation3], 0
    %12 = vsyncpa [#allocation5], 0
    // Predicated region
    $region2: #{tpu_custom_call.1} parent=1 // pred_check
      _
    $region3: #{tpu_custom_call.1} parent=1 // pred_check_branch
      %14 = sbr.rel (0) target = $region5
    $region4: #{tpu_custom_call.1} parent=1 // pred_region
      _
    $region5: #{tpu_custom_call.1} parent=1 // pred_fallthru
      _
    // Predicated region
    $region6: #{tpu_custom_call.1} parent=1 // pred_check
      _
    $region7: #{tpu_custom_call.1} parent=1 // pred_check_branch
      %16 = sbr.rel (0) target = $region9
    $region8: #{tpu_custom_call.1} parent=1 // pred_region
      _
    $region9: #{tpu_custom_call.1} parent=1 // pred_fallthru
      _
    // Predicated region
    $region10: #{tpu_custom_call.1} parent=1 // pred_check
      _
    $region11: #{tpu_custom_call.1} parent=1 // pred_check_branch
      %18 = sbr.rel (0) target = $region13
    $region12: #{tpu_custom_call.1} parent=1 // pred_region
      _
    $region13: #{tpu_custom_call.1} parent=1 // pred_fallthru
      _
    %v19 = vld [vmem:[%s0] sm:$0xff]
    %v20 = vld [vmem:[%s1] sm:$0xff]
    %v21 = vld [vmem:[%s1 + $0x8] sm:$0xff]
    %v22 = vld [vmem:[%s1 + $0x10] sm:$0xff]
    %v23 = vld [vmem:[%s1 + $0x18] sm:$0xff]
    %vm24 = vcmask 261120
    %v26 = vsel %vm24, %v19, 0
    %28 = vmatprep.subr.mxu0 0.0
    %29 = vmatpush1.msra.mxu0 %v20
    %30 = vmatprep.subr.mxu0 0.0
    %31 = vmatpush1.msra.mxu0 %v21
    %32 = vmatprep.subr.mxu0 0.0
    %33 = vmatpush1.msra.mxu0 %v22
    %34 = vmatprep.subr.mxu0 0.0
    %35 = vmatpush1.msra.mxu0 %v23
    %36 = vmatprep.subr.mxu0 0.0
    %37 = vmatpush1.msra.mxu0 0.0
    %38 = vmatprep.subr.mxu0 0.0
    %39 = vmatpush1.msra.mxu0 0.0
    %40 = vmatprep.subr.mxu0 0.0
    %41 = vmatpush1.msra.mxu0 0.0
    %42 = vmatprep.subr.mxu0 0.0
    %43 = vmatpush1.msra.mxu0 0.0
    %44 = vmatprep.subr.mxu0 0.0
    %45 = vmatpush1.msra.mxu0 0.0
    %46 = vmatprep.subr.mxu0 0.0
    %47 = vmatpush1.msra.mxu0 0.0
    %48 = vmatprep.subr.mxu0 0.0
    %49 = vmatpush1.msra.mxu0 0.0
    %50 = vmatprep.subr.mxu0 0.0
    %51 = vmatpush1.msra.mxu0 0.0
    %52 = vmatprep.subr.mxu0 0.0
    %53 = vmatpush1.msra.mxu0 0.0
    %54 = vmatprep.subr.mxu0 0.0
    %55 = vmatpush1.msra.mxu0 0.0
    %56 = vmatprep.subr.mxu0 0.0
    %57 = vmatpush1.msra.mxu0 0.0
    %58 = vmatprep.subr.mxu0 0.0
    %59 = vmatpush1.msra.mxu0 0.0
    %60 = vmatprep.subr.mxu0 0.0
    %61 = vmatpush1.msra.mxu0 0.0
    %62 = vmatprep.subr.mxu0 0.0
    %63 = vmatpush1.msra.mxu0 0.0
    %64 = vmatprep.subr.mxu0 0.0
    %65 = vmatpush1.msra.mxu0 0.0
    %66 = vmatprep.subr.mxu0 0.0
    %67 = vmatpush1.msra.mxu0 0.0
    %68 = vmatprep.subr.mxu0 0.0
    %69 = vmatpush1.msra.mxu0 0.0
    %70 = vmatprep.subr.mxu0 0.0
    %71 = vmatpush1.msra.mxu0 0.0
    %72 = vmatprep.subr.mxu0 0.0
    %73 = vmatpush1.msra.mxu0 0.0
    %74 = vmatprep.subr.mxu0 0.0
    %75 = vmatpush1.msra.mxu0 0.0
    %76 = vmatprep.subr.mxu0 0.0
    %77 = vmatpush1.msra.mxu0 0.0
    %78 = vmatprep.subr.mxu0 0.0
    %79 = vmatpush1.msra.mxu0 0.0
    %80 = vmatprep.subr.mxu0 0.0
    %81 = vmatpush1.msra.mxu0 0.0
    %82 = vmatprep.subr.mxu0 0.0
    %83 = vmatpush1.msra.mxu0 0.0
    %84 = vmatprep.subr.mxu0 0.0
    %85 = vmatpush1.msra.mxu0 0.0
    %86 = vmatprep.subr.mxu0 0.0
    %87 = vmatpush1.msra.mxu0 0.0
    %88 = vmatprep.subr.mxu0 0.0
    %89 = vmatpush1.msra.mxu0 0.0
    %90 = vmatprep.subr.mxu0 0.0
    %91 = vmatpush1.msra.mxu0 0.0
    %92 = vmatprep.mubr.f32.mxu0 0.0
    %93 = vmatmul.mubr.f32.gmra.mrb[0].mxu0 %v26
    %v94 = vpop.f32.mrb[0].mxu0
    %v95 = vadd.f32 0.0, %v94
    %v96 = vpop.f32.mrb[0].mxu0
    %97 = vdwg.mxu0
    %vm98 = vcmask 80896
    %99 = vst.msk [vmem:[#allocation4] sm:$0xff] %vm98, %v95
    %v100 = vmul.f32 %v95, 2.0
    %v101 = vsel %vm98, %v100, -inf
    %102 = vmax.xlane.f32.xlu0 %v101
    %v103 = vpop.xlane.xlu0 %102
    %v104 = vsub.f32 %v100, %v103
    %v105 = vmul.f32 %v104, 1.442695
    %v106 = vpow.pop %v105
    %v107 = vsel %vm98, %v106, 0.0
    %108 = vadd.xlane.f32.xlu0 %v107
    %v109 = vpop.xlane.xlu0 %108
    %v110 = vrcp.pop %v109
    %v111 = vmul.f32 %v106, %v110
    %112 = vst.msk [vmem:[#allocation2] sm:$0xff] %vm98, %v111
    %v113 = vld [vmem:[%s2] sm:$0xff]
    %v114 = vld [vmem:[%s2 + $0x8] sm:$0x3]
    %v116 = vsel %vm98, %v111, 0
    %vm118 = vcmask 1041408
    %v120 = vsel %vm118, %v114, 0
    %122 = vmatprep.subr.mxu0 0.0
    %123 = vmatpush1.msra.mxu0 %v113
    %124 = vmatprep.subr.mxu0 0.0
    %125 = vmatpush1.msra.mxu0 %v120
    %126 = vmatprep.subr.mxu0 0.0
    %127 = vmatpush1.msra.mxu0 0.0
    %128 = vmatprep.subr.mxu0 0.0
    %129 = vmatpush1.msra.mxu0 0.0
    %130 = vmatprep.subr.mxu0 0.0
    %131 = vmatpush1.msra.mxu0 0.0
    %132 = vmatprep.subr.mxu0 0.0
    %133 = vmatpush1.msra.mxu0 0.0
    %134 = vmatprep.subr.mxu0 0.0
    %135 = vmatpush1.msra.mxu0 0.0
    %136 = vmatprep.subr.mxu0 0.0
    %137 = vmatpush1.msra.mxu0 0.0
    %138 = vmatprep.subr.mxu0 0.0
    %139 = vmatpush1.msra.mxu0 0.0
    %140 = vmatprep.subr.mxu0 0.0
    %141 = vmatpush1.msra.mxu0 0.0
    %142 = vmatprep.subr.mxu0 0.0
    %143 = vmatpush1.msra.mxu0 0.0
    %144 = vmatprep.subr.mxu0 0.0
    %145 = vmatpush1.msra.mxu0 0.0
    %146 = vmatprep.subr.mxu0 0.0
    %147 = vmatpush1.msra.mxu0 0.0
    %148 = vmatprep.subr.mxu0 0.0
    %149 = vmatpush1.msra.mxu0 0.0
    %150 = vmatprep.subr.mxu0 0.0
    %151 = vmatpush1.msra.mxu0 0.0
    %152 = vmatprep.subr.mxu0 0.0
    %153 = vmatpush1.msra.mxu0 0.0
    %154 = vmatprep.subr.mxu0 0.0
    %155 = vmatpush1.msra.mxu0 0.0
    %156 = vmatprep.subr.mxu0 0.0
    %157 = vmatpush1.msra.mxu0 0.0
    %158 = vmatprep.subr.mxu0 0.0
    %159 = vmatpush1.msra.mxu0 0.0
    %160 = vmatprep.subr.mxu0 0.0
    %161 = vmatpush1.msra.mxu0 0.0
    %162 = vmatprep.subr.mxu0 0.0
    %163 = vmatpush1.msra.mxu0 0.0
    %164 = vmatprep.subr.mxu0 0.0
    %165 = vmatpush1.msra.mxu0 0.0
    %166 = vmatprep.subr.mxu0 0.0
    %167 = vmatpush1.msra.mxu0 0.0
    %168 = vmatprep.subr.mxu0 0.0
    %169 = vmatpush1.msra.mxu0 0.0
    %170 = vmatprep.subr.mxu0 0.0
    %171 = vmatpush1.msra.mxu0 0.0
    %172 = vmatprep.subr.mxu0 0.0
    %173 = vmatpush1.msra.mxu0 0.0
    %174 = vmatprep.subr.mxu0 0.0
    %175 = vmatpush1.msra.mxu0 0.0
    %176 = vmatprep.subr.mxu0 0.0
    %177 = vmatpush1.msra.mxu0 0.0
    %178 = vmatprep.subr.mxu0 0.0
    %179 = vmatpush1.msra.mxu0 0.0
    %180 = vmatprep.subr.mxu0 0.0
    %181 = vmatpush1.msra.mxu0 0.0
    %182 = vmatprep.subr.mxu0 0.0
    %183 = vmatpush1.msra.mxu0 0.0
    %184 = vmatprep.subr.mxu0 0.0
    %185 = vmatpush1.msra.mxu0 0.0
    %186 = vmatprep.mubr.f32.mxu0 0.0
    %187 = vmatmul.mubr.f32.gmra.mrb[0].mxu0 %v116
    %v188 = vpop.f32.mrb[0].mxu0
    %v189 = vadd.f32 0.0, %v188
    %v190 = vpop.f32.mrb[0].mxu0
    %191 = vdwg.mxu0
    %vm192 = vcmask 31744
    %193 = vst.msk [vmem:[%s3] sm:$0xff] %vm192, %v189
    // Predicated region
    $region14: #{tpu_custom_call.1} parent=1 // pred_check
      _
    $region15: #{tpu_custom_call.1} parent=1 // pred_check_branch
      %195 = sbr.rel (0) target = $region17
    $region16: #{tpu_custom_call.1} parent=1 // pred_region
      _
    $region17: #{tpu_custom_call.1} parent=1 // pred_fallthru
      _
    // Predicated region
    $region18: #{tpu_custom_call.1} parent=1 // pred_check
      _
    $region19: #{tpu_custom_call.1} parent=1 // pred_check_branch
      %197 = sbr.rel (0) target = $region21
    $region20: #{tpu_custom_call.1} parent=1 // pred_region
      %s199 = ssub.s32 128, 128
      %200 = vsyncadd [#allocation3], %s199
      %s202 = sshll.u32 [#allocation2], 4
      %s203 = int_to_ptr.vmem [resolvable:$true] %s202
      %205 = dma.vmem_to_hbm [thread:$0]  %s203, 128, %s4, [#allocation3]
    $region21: #{tpu_custom_call.1} parent=1 // pred_fallthru
      _
    // Predicated region
    $region22: #{tpu_custom_call.1} parent=1 // pred_check
      _
    $region23: #{tpu_custom_call.1} parent=1 // pred_check_branch
      %207 = sbr.rel (0) target = $region25
    $region24: #{tpu_custom_call.1} parent=1 // pred_region
      %s209 = ssub.s32 128, 128
      %210 = vsyncadd [#allocation5], %s209
      %s212 = sshll.u32 [#allocation4], 4
      %s213 = int_to_ptr.vmem [resolvable:$true] %s212
      %215 = dma.vmem_to_hbm [thread:$0]  %s213, 128, %s5, [#allocation5]
    $region25: #{tpu_custom_call.1} parent=1 // pred_fallthru
      _
    // Predicated region
    $region26: #{tpu_custom_call.1} parent=1 // pred_check
      _
    $region27: #{tpu_custom_call.1} parent=1 // pred_check_branch
      %217 = sbr.rel (0) target = $region29
    $region28: #{tpu_custom_call.1} parent=1 // pred_region
      _
    $region29: #{tpu_custom_call.1} parent=1 // pred_fallthru
      _
    // Predicated region
    $region30: #{tpu_custom_call.1} parent=1 // pred_check
      _
    $region31: #{tpu_custom_call.1} parent=1 // pred_check_branch
      %219 = sbr.rel (0) target = $region33
    $region32: #{tpu_custom_call.1} parent=1 // pred_region
      %220 = dma.done [#allocation3], 128
    $region33: #{tpu_custom_call.1} parent=1 // pred_fallthru
      _
    // Predicated region
    $region34: #{tpu_custom_call.1} parent=1 // pred_check
      _
    $region35: #{tpu_custom_call.1} parent=1 // pred_check_branch
      %222 = sbr.rel (0) target = $region37
    $region36: #{tpu_custom_call.1} parent=1 // pred_region
      %223 = dma.done [#allocation5], 128
    $region37: #{tpu_custom_call.1} parent=1 // pred_fallthru
      _
    %224 = vsyncpa [#allocation3], 1
    %225 = vsyncpa [#allocation5], 1

</llo_original>
